<compile_context>
chip_gen: v5e
topology: v5e:2x2
jax: 0.10.0
libtpu: 0.0.40
codegen_flags: <defaults>
</compile_context>

<pallas_src>
import functools

import jax
import jax.numpy as jnp
from jax.experimental import pallas as pl
from jax.experimental.pallas import tpu as pltpu


def _downsample_avg_kernel(x_ref, w_ref, b_ref, o_ref, *, n_rows):
    # x_ref: (TH, n_rows, Wo, K)   w_ref: (K, TCO)   b_ref: (1, TCO) f32
    # o_ref: (TH, Wo, TCO)
    th, wo, c_out = o_ref.shape
    k = w_ref.shape[0]
    m = th * wo
    w = w_ref[...]
    # Pooling rows accumulate through the MXU in f32 (avoids bf16 VPU adds on
    # v5e and any activation downcast); columns + conv + BN scale ride K.
    # NOTE: the (TH, Wo, K)->(TH*Wo, K) reshape is a free relayout when Wo % 8
    # == 0 (sublane merge); otherwise Mosaic may insert a tile-local copy.
    y = jnp.dot(x_ref[:, 0, :, :].reshape(m, k), w,
                preferred_element_type=jnp.float32)
    for r in range(1, n_rows):
        y = y + jnp.dot(x_ref[:, r, :, :].reshape(m, k), w,
                        preferred_element_type=jnp.float32)
    y = y + b_ref[...]                               # folded BN bias (f32 VPU)
    o_ref[...] = y.reshape(th, wo, c_out).astype(o_ref.dtype)


def _prep_weight(conv_w):
    """PyTorch Conv2d weight (C_out, C_in, 1, 1) or (C_out, C_in) -> (C_in, C_out)."""
    w = jnp.asarray(conv_w)
    if w.ndim == 4:
        w = w[:, :, 0, 0]
    return jnp.transpose(w, (1, 0))


def _vmem_budget():
    """Return (tile-picking budget, vmem_limit_bytes) derived from device VMEM."""
    try:
        cap = int(pltpu.get_tpu_info().vmem_capacity_bytes)   # per TensorCore
    except Exception:
        cap = 64 * 1024 * 1024            # conservative fallback (v7x per-TC)
    # v5e/v6e (128 MiB physical): 96 MiB limit.  v7x (64 MiB): 48 MiB limit.
    vmem_limit = min(cap * 3 // 4, 96 * 1024 * 1024)
    budget = (vmem_limit * 7) // 8        # headroom for Mosaic-internal scratch
    return budget, vmem_limit


def _pick_tile_co(c_out):
    """C_out block: full if small, else a lane-aligned divisor <= 512."""
    if c_out <= 512:
        return c_out
    for tco in (512, 256, 128):
        if c_out % tco == 0:
            return tco
    return c_out


def _pick_tile_h(Ho, Wo, K, n_rows, tco, n_co, itemsize, budget_bytes,
                 min_h_blocks):
    """Largest TH dividing Ho s.t. every VMEM-resident buffer fits the budget
    and at least min_h_blocks blocks remain along Ho (pipelining / 2-TC)."""
    w_bufs = 1 if n_co == 1 else 2                    # Buffered(1) when resident
    fixed = w_bufs * K * tco * itemsize + 2 * tco * 4  # weight + f32 bias
    best = 1
    for th in range(1, Ho + 1):
        if Ho % th or Ho // th < min_h_blocks:
            continue
        in_tile = th * n_rows * Wo * K * itemsize      # double-buffered
        out_tile = th * Wo * tco * itemsize            # double-buffered
        acc_f32 = th * Wo * tco * 4                    # f32 matmul result
        total = fixed + 2 * in_tile + 2 * out_tile + acc_f32
        if total <= budget_bytes:
            best = th
    return best


def downsample_avg_nhwc(x, conv_w, bn_gamma, bn_beta, bn_mean, bn_var,
                        *, stride=2, eps=1e-5):
    """Fused DownsampleAvg forward on NHWC input (preferred, lane-dense path).

    NOTE: when 2*C_in < 128 or C_out < 128 the last (lane) dims underfill the
    128-lane vregs and HBM efficiency drops; early small-channel stages will
    sit below roofline regardless of tiling.
    """
    N, H, W, C_in = x.shape
    w_io = _prep_weight(conv_w)                       # (C_in, C_out)
    C_out = w_io.shape[1]

    scale = (jnp.asarray(bn_gamma) /
             jnp.sqrt(jnp.asarray(bn_var) + eps)).astype(jnp.float32)       # (C_out,)
    bias = (jnp.asarray(bn_beta) -
            jnp.asarray(bn_mean) * scale).reshape(1, C_out).astype(jnp.float32)

    if stride > 1:
        # ceil_mode=True + count_include_pad=False for a 2x2/stride-2 window is
        # reproduced exactly by replicating the last row/column to even H, W.
        pad_h, pad_w = H % 2, W % 2
        if pad_h or pad_w:
            x = jnp.pad(x, ((0, 0), (0, pad_h), (0, pad_w), (0, 0)), mode="edge")
            H, W = H + pad_h, W + pad_w
        # TODO(synk): AvgPool2dSame path (dilation > 1, avg_stride == 1) not implemented.
        Ho, Wo = H // 2, W // 2
        n_rows, K = 2, 2 * C_in
        # Free reshape (adjacent-dim split only): no HBM transpose.
        x_r = x.reshape(N, Ho, 2, Wo, K)
        # Fold 1/4 (avg pool) and BN scale into the weight; duplicate for the
        # two pooling columns that now live in the K dimension.
        w_eff = (w_io * (scale[None, :] * 0.25)).astype(x.dtype)
        w_k = jnp.concatenate([w_eff, w_eff], axis=0)  # (2*C_in, C_out)
    else:
        Ho, Wo = H, W
        n_rows, K = 1, C_in
        x_r = x.reshape(N, Ho, 1, Wo, K)
        w_k = (w_io * scale[None, :]).astype(x.dtype)

    TCO = _pick_tile_co(C_out)
    n_co = C_out // TCO

    budget, vmem_limit = _vmem_budget()
    itemsize = jnp.dtype(x.dtype).itemsize
    # Keep >= ~8 spatial grid steps (even with N == 1) so v7x's 2 TensorCores
    # both get work and the pipeline always has a next block to prefetch.
    min_h_blocks = min(Ho, -(-8 // N))
    TH = _pick_tile_h(Ho, Wo, K, n_rows, TCO, n_co, itemsize, budget,
                      min_h_blocks)

    grid = (N, Ho // TH, n_co)                         # co innermost: input resident

    # Weight/bias blocks never change when n_co == 1: single-buffer them so the
    # unused second copy (up to several MiB) does not eat VMEM.
    resident = {"pipeline_mode": pl.Buffered(1)} if n_co == 1 else {}

    kernel = functools.partial(_downsample_avg_kernel, n_rows=n_rows)

    cost = pl.CostEstimate(
        flops=2 * N * Ho * Wo * n_rows * K * C_out,
        transcendentals=0,
        bytes_accessed=(x_r.size * itemsize + w_k.size * itemsize
                        + bias.size * 4 + N * Ho * Wo * C_out * itemsize),
    )

    out = pl.pallas_call(
        kernel,
        out_shape=jax.ShapeDtypeStruct((N, Ho, Wo, C_out), x.dtype),
        grid_spec=pltpu.PrefetchScalarGridSpec(
            num_scalar_prefetch=0,
            grid=grid,
            in_specs=[
                # Activation block constant over the co axis -> stays VMEM-resident.
                pl.BlockSpec((None, TH, n_rows, Wo, K),
                             lambda n, h, co: (n, h, 0, 0, 0)),
                pl.BlockSpec((K, TCO), lambda n, h, co: (0, co), **resident),
                pl.BlockSpec((1, TCO), lambda n, h, co: (0, co), **resident),
            ],
            out_specs=pl.BlockSpec((None, TH, Wo, TCO),
                                   lambda n, h, co: (n, h, 0, co)),
        ),
        compiler_params=pltpu.CompilerParams(
            dimension_semantics=("parallel", "parallel", "arbitrary"),
            vmem_limit_bytes=vmem_limit,
        ),
        cost_estimate=cost,
    )(x_r, w_k, bias)
    return out


def downsample_avg(x_nchw, conv_w, bn_gamma, bn_beta, bn_mean, bn_var,
                   *, stride=2, eps=1e-5):
    """PyTorch-parity wrapper (NCHW in / NCHW out).

    The two boundary transposes are full-tensor HBM passes; prefer
    downsample_avg_nhwc when the surrounding model is channels-last.
    # TODO(synk): for an NCHW-only pipeline, emit NCHW directly from the kernel
    # (per-tile XLU transpose into a (C_out, TH, Wo) out block) to avoid the
    # post-kernel full-tensor transpose.
    """
    x = jnp.transpose(x_nchw, (0, 2, 3, 1))
    out = downsample_avg_nhwc(x, conv_w, bn_gamma, bn_beta, bn_mean, bn_var,
                              stride=stride, eps=eps)
    return jnp.transpose(out, (0, 3, 1, 2))


def _reference(x_nchw, conv_w, bn_gamma, bn_beta, bn_mean, bn_var,
               *, stride=2, eps=1e-5):
    # Pure-JAX reference: AvgPool2d(2,2, ceil_mode=True, count_include_pad=False)
    # (if stride>1) -> 1x1 conv -> eval-mode BN.
    w = jnp.asarray(conv_w)
    if w.ndim == 4:
        w = w[:, :, 0, 0]                             # (C_out, C_in)
    if stride > 1:
        N, C, H, W = x_nchw.shape
        Ho, Wo = -(-H // 2), -(-W // 2)
        xp = jnp.pad(x_nchw, ((0, 0), (0, 0), (0, 2 * Ho - H), (0, 2 * Wo - W)))
        s = xp.reshape(N, C, Ho, 2, Wo, 2).sum(axis=(3, 5))
        cnt = jnp.pad(jnp.ones((H, W), jnp.float32),
                      ((0, 2 * Ho - H), (0, 2 * Wo - W)))
        cnt = cnt.reshape(Ho, 2, Wo, 2).sum(axis=(1, 3))
        xp = s / cnt[None, None]
    else:
        xp = x_nchw
    y = jnp.einsum("nchw,oc->nohw", xp, w)
    s_bn = bn_gamma / jnp.sqrt(bn_var + eps)
    b_bn = bn_beta - bn_mean * s_bn
    return y * s_bn[None, :, None, None] + b_bn[None, :, None, None]


if __name__ == "__main__":
    key = jax.random.PRNGKey(0)
    k1, k2, k3, k4, k5, k6, k7 = jax.random.split(key, 7)

    N, C_in, H, W = 2, 4, 16, 16
    C_out = 8

    x = jax.random.normal(k1, (N, C_in, H, W), dtype=jnp.float32)
    # PyTorch Conv2d(in_chs, out_chs, 1, bias=False) weight layout: (C_out, C_in, 1, 1)
    conv_w = jax.random.normal(k2, (C_out, C_in, 1, 1), dtype=jnp.float32) * 0.1
    bn_gamma = 1.0 + 0.1 * jax.random.normal(k3, (C_out,), dtype=jnp.float32)
    bn_beta = 0.1 * jax.random.normal(k4, (C_out,), dtype=jnp.float32)
    bn_mean = 0.1 * jax.random.normal(k5, (C_out,), dtype=jnp.float32)
    bn_var = jnp.abs(1.0 + 0.1 * jax.random.normal(k6, (C_out,), dtype=jnp.float32))

    # stride=2 path (AvgPool 2x2 -> 1x1 conv -> BN)
    out2 = jax.block_until_ready(
        downsample_avg(x, conv_w, bn_gamma, bn_beta, bn_mean, bn_var, stride=2))
    ref2 = _reference(x, conv_w, bn_gamma, bn_beta, bn_mean, bn_var, stride=2)
    assert out2.shape == (N, C_out, H // 2, W // 2), out2.shape
    assert jnp.allclose(out2, ref2, atol=1e-4, rtol=1e-4), \
        float(jnp.max(jnp.abs(out2 - ref2)))

    # stride=1 path (Identity pool -> 1x1 conv -> BN)
    out1 = jax.block_until_ready(
        downsample_avg(x, conv_w, bn_gamma, bn_beta, bn_mean, bn_var, stride=1))
    ref1 = _reference(x, conv_w, bn_gamma, bn_beta, bn_mean, bn_var, stride=1)
    assert out1.shape == (N, C_out, H, W), out1.shape
    assert jnp.allclose(out1, ref1, atol=1e-4, rtol=1e-4), \
        float(jnp.max(jnp.abs(out1 - ref1)))

    # stride=2 with odd spatial dims: ceil_mode=True / count_include_pad=False path
    x_odd = jax.random.normal(k7, (N, C_in, 15, 15), dtype=jnp.float32)
    out3 = jax.block_until_ready(
        downsample_avg(x_odd, conv_w, bn_gamma, bn_beta, bn_mean, bn_var, stride=2))
    ref3 = _reference(x_odd, conv_w, bn_gamma, bn_beta, bn_mean, bn_var, stride=2)
    assert out3.shape == (N, C_out, 8, 8), out3.shape
    assert jnp.allclose(out3, ref3, atol=1e-4, rtol=1e-4), \
        float(jnp.max(jnp.abs(out3 - ref3)))

    print("KERNEL_OK")
</pallas_src>

<mosaic_0001>
module attributes {stable_mosaic.version = 11 : i64} {
  func.func @_downsample_avg_kernel(%arg0: i32, %arg1: i32, %arg2: i32, %arg3: memref<1x2x2x8x8xf32, #tpu.memory_space<vmem>>, %arg4: memref<8x8xf32, #tpu.memory_space<vmem>>, %arg5: memref<1x8xf32, #tpu.memory_space<vmem>>, %arg6: memref<1x2x8x8xf32, #tpu.memory_space<vmem>>) attributes {dimension_semantics = [#tpu.dimension_semantics<parallel>, #tpu.dimension_semantics<parallel>, #tpu.dimension_semantics<arbitrary>], iteration_bounds = array<i64: 2, 4, 1>, scalar_prefetch = 0 : i64, scratch_operands = 0 : i64, tpu.core_type = #tpu.core_type<tc>, window_params = [{transform_indices = @transform_0, window_bounds = array<i64: 1, 2, 2, 8, 8>}, {pipeline_mode = #tpu.pipeline_mode<synchronous>, transform_indices = @transform_1, window_bounds = array<i64: 8, 8>}, {pipeline_mode = #tpu.pipeline_mode<synchronous>, transform_indices = @transform_2, window_bounds = array<i64: 1, 8>}, {transform_indices = @transform_3, window_bounds = array<i64: 1, 2, 8, 8>}]} {
    %c0 = arith.constant 0 : index
    %c0_0 = arith.constant 0 : index
    %0 = vector.load %arg4[%c0, %c0_0] : memref<8x8xf32, #tpu.memory_space<vmem>>, vector<8x8xf32>
    %c0_1 = arith.constant 0 : index
    %c0_2 = arith.constant 0 : index
    %c0_3 = arith.constant 0 : index
    %c0_4 = arith.constant 0 : index
    %c0_5 = arith.constant 0 : index
    %1 = vector.load %arg3[%c0_1, %c0_2, %c0_3, %c0_4, %c0_5] : memref<1x2x2x8x8xf32, #tpu.memory_space<vmem>>, vector<1x2x1x8x8xf32>
    %2 = vector.shape_cast %1 : vector<1x2x1x8x8xf32> to vector<2x8x8xf32>
    %3 = vector.shape_cast %2 : vector<2x8x8xf32> to vector<16x8xf32>
    %cst = arith.constant dense<0.000000e+00> : vector<16x8xf32>
    %4 = tpu.matmul %3, %0, %cst {dimension_numbers = #tpu.dot_dimension_numbers<[1], [0], [0], [1], [0, 0, 1, 1], [], []>} : vector<16x8xf32>, vector<8x8xf32>, vector<16x8xf32> -> vector<16x8xf32>
    %c0_6 = arith.constant 0 : index
    %c0_7 = arith.constant 0 : index
    %c1 = arith.constant 1 : index
    %c0_8 = arith.constant 0 : index
    %c0_9 = arith.constant 0 : index
    %5 = vector.load %arg3[%c0_6, %c0_7, %c1, %c0_8, %c0_9] : memref<1x2x2x8x8xf32, #tpu.memory_space<vmem>>, vector<1x2x1x8x8xf32>
    %6 = vector.shape_cast %5 : vector<1x2x1x8x8xf32> to vector<2x8x8xf32>
    %7 = vector.shape_cast %6 : vector<2x8x8xf32> to vector<16x8xf32>
    %cst_10 = arith.constant dense<0.000000e+00> : vector<16x8xf32>
    %8 = tpu.matmul %7, %0, %cst_10 {dimension_numbers = #tpu.dot_dimension_numbers<[1], [0], [0], [1], [0, 0, 1, 1], [], []>} : vector<16x8xf32>, vector<8x8xf32>, vector<16x8xf32> -> vector<16x8xf32>
    %9 = arith.addf %4, %8 : vector<16x8xf32>
    %c0_11 = arith.constant 0 : index
    %c0_12 = arith.constant 0 : index
    %10 = vector.load %arg5[%c0_11, %c0_12] : memref<1x8xf32, #tpu.memory_space<vmem>>, vector<1x8xf32>
    %11 = vector.broadcast %10 : vector<1x8xf32> to vector<16x8xf32>
    %12 = arith.addf %9, %11 : vector<16x8xf32>
    %13 = vector.shape_cast %12 : vector<16x8xf32> to vector<2x8x8xf32>
    %c0_13 = arith.constant 0 : index
    %c0_14 = arith.constant 0 : index
    %c0_15 = arith.constant 0 : index
    %c0_16 = arith.constant 0 : index
    %14 = vector.load %arg6[%c0_13, %c0_14, %c0_15, %c0_16] : memref<1x2x8x8xf32, #tpu.memory_space<vmem>>, vector<1x2x8x8xf32>
    %15 = vector.shape_cast %14 : vector<1x2x8x8xf32> to vector<2x8x8xf32>
    %16 = vector.shape_cast %13 : vector<2x8x8xf32> to vector<1x2x8x8xf32>
    tpu.vector_store %arg6[%c0_13, %c0_14, %c0_15, %c0_16], %16 {strides = array<i32>} : memref<1x2x8x8xf32, #tpu.memory_space<vmem>>, vector<1x2x8x8xf32>,
    return
  }
  func.func @transform_0(%arg0: i32, %arg1: i32, %arg2: i32) -> (i32, i32, i32, i32, i32) {
    %c0_i32 = arith.constant 0 : i32
    %c0_i32_0 = arith.constant 0 : i32
    %c0_i32_1 = arith.constant 0 : i32
    %c0_i32_2 = arith.constant 0 : i32
    return %arg0, %arg1, %c0_i32, %c0_i32_0, %c0_i32_1 : i32, i32, i32, i32, i32
  }
  func.func @transform_1(%arg0: i32, %arg1: i32, %arg2: i32) -> (i32, i32) {
    %c0_i32 = arith.constant 0 : i32
    %c0_i32_0 = arith.constant 0 : i32
    return %c0_i32, %arg2 : i32, i32
  }
  func.func @transform_2(%arg0: i32, %arg1: i32, %arg2: i32) -> (i32, i32) {
    %c0_i32 = arith.constant 0 : i32
    %c0_i32_0 = arith.constant 0 : i32
    return %c0_i32, %arg2 : i32, i32
  }
  func.func @transform_3(%arg0: i32, %arg1: i32, %arg2: i32) -> (i32, i32, i32, i32) {
    %c0_i32 = arith.constant 0 : i32
    %c0_i32_0 = arith.constant 0 : i32
    return %arg0, %arg1, %c0_i32, %arg2 : i32, i32, i32, i32
  }
}

</mosaic_0001>

<llo_original>
// kernel: tpu_custom_call.1
$region0: #{tpu_custom_call.1}
  #allocation0 [shape = 'u32[]', space=smem, size = 0x4, offset = 0x4, fixed_abs, tag = 'smem constant byte address 0x4 - core index']
  #allocation1 [shape = 'u32[72,128]{1,0:T(1,128)}', space=vmem, size = 0x9000, scoped, tag = 'internal scratch']
  %s0 = inlined_call_operand.hbm [shape: f32[2,8,2,8,8], index: 0, kind: input, shape index: {}]
  %s1 = inlined_call_operand.hbm [shape: f32[8,8], index: 1, kind: input, shape index: {}]
  %s2 = inlined_call_operand.vmem [shape: f32[1,8], index: 2, kind: input, shape index: {}]
  %s3 = inlined_call_operand.hbm [shape: f32[2,8,8,8], index: 3, kind: output, shape index: {}]
  %s4 = sld [smem:[#allocation0]]
  $region53: #{tpu_custom_call.1} parent=0
    _
  %s6 = ssub.s32 1, %s4
  %s7 = scalar_select 0, %s6, %s4
  $region1: #{tpu_custom_call.1} parent=0
    #allocation2 [shape = 'u8[32768]{0}', space=vmem, size = 0x8000, scoped, tag = 'input window, operand 0']
    #allocation3 [shape = 's32[2]{0}', space=sflag, size = 0x8, scoped, tag = 'scoped memory for tpu_custom_call.1']
    #allocation4 [shape = 's32[2]{0}', space=sflag, size = 0x8, scoped, tag = 'scoped memory for tpu_custom_call.1']
    #allocation5 [shape = 'u8[4096]{0}', space=vmem, size = 0x1000, scoped, tag = 'input window, operand 1, single buffered']
    #allocation6 [shape = 's32[1]{0}', space=sflag, size = 0x4, scoped, tag = 'scoped memory for tpu_custom_call.1']
    #allocation7 [shape = 'u8[16384]{0}', space=vmem, size = 0x4000, scoped, tag = 'output window, operand 0']
    %8 = vsyncpa [#allocation3], 0
    %s9 = scalar_lea.sflag [#allocation3], 1
    %10 = vsyncpa %s9, 0
    %11 = vsyncpa [#allocation6], 0
    %12 = vsyncpa [#allocation4], 0
    %s13 = scalar_lea.sflag [#allocation4], 1
    %14 = vsyncpa %s13, 0
    loop: start=0, step=1, limit=10
    $region2: #{tpu_custom_call.1} parent=1 // loop_pre_header
      _
    $region3: #{tpu_custom_call.1} parent=1 // loop_header
      %s16 = sphi 0, %s20
      %p17 = scmp.ge.s32.totalorder %s16, 10
      %s23 = sphi 0, %s42
      %s24 = sphi 0, %s38
      %s25 = sphi 0, %s34
      %s26 = sphi 0, %s23
      %s27 = sphi 0, %s24
      %s28 = sphi 0, %s25
      %s29 = sphi 0, %s26
      %s30 = sphi 0, %s27
      %s31 = sphi 0, %s28
      %s47 = sphi 0, %s49
      %s50 = sphi 0, %s47
      %s51 = sphi 0, %s50
      %s67 = sphi 0, %s51
      %s73 = sphi 0, %s75
      %s76 = sphi 0, %s73
      %s77 = sphi 0, %s76
      %s93 = sphi 0, %s77
      %s99 = sphi 0, %s101
      %s102 = sphi 0, %s99
      %s103 = sphi 0, %s102
      %s119 = sphi 0, %s103
      %s129 = sphi 0, %s131
      %s132 = sphi 0, %s129
      %s133 = sphi 0, %s132
      %s149 = sphi 0, %s133
    $region4: #{tpu_custom_call.1} parent=1 // loop_header_branch
      %19 = sbr.rel (%p17) target = $region8
    $region5: #{tpu_custom_call.1} parent=1 // loop_body
      %s21 = ssub.s32 %s16, 1
      %s22 = ssub.s32 %s16, 2
      %s32 = sadd.s32 1, %s25
      %p33 = scmp.ge.s32.totalorder %s32, 1
      %s34 = scalar_select %p33, 0, %s32
      %s35 = sadd.s32 1, %s24
      %s36 = scalar_select %p33, %s35, %s24
      %p37 = scmp.ge.s32.totalorder %s36, 4
      %s38 = scalar_select %p37, 0, %s36
      %s39 = sadd.s32 1, %s23
      %s40 = scalar_select %p37, %s39, %s23
      %p41 = scmp.ge.s32.totalorder %s40, 2
      %s42 = scalar_select %p41, 0, %s40
      %s43 = ssub.s32 %s23, %s42
      %s44 = ssub.s32 %s24, %s38
      %s45 = sor.u32 %s43, %s44
      %p46 = scmp.eq.s32.totalorder %s45, 0
      %s48 = sadd.s32 %s47, 1
      %s49 = scalar_select %p46, %s47, %s48
      %p52 = pneg %p46
      %p53 = scmp.eq.s32.totalorder %s16, 7
      %p54 = por %p52, %p53
      %p55 = scmp.ne.s32.totalorder %s47, %s50
      %p56 = scmp.eq.s32.totalorder %s16, 0
      %p57 = por %p55, %p56
      %p58 = scmp.ne.s32.totalorder %s47, %s50
      %p59 = scmp.eq.s32.totalorder %s21, 7
      %p60 = por %p58, %p59
      %p61 = scmp.ne.s32.totalorder %s50, %s51
      %p62 = scmp.eq.s32.totalorder %s21, 0
      %p63 = por %p61, %p62
      %p64 = scmp.ne.s32.totalorder %s50, %s51
      %p65 = scmp.eq.s32.totalorder %s22, 7
      %p66 = por %p64, %p65
      %p68 = scmp.ne.s32.totalorder %s51, %s67
      %p69 = scmp.eq.s32.totalorder %s22, 0
      %p70 = por %p68, %p69
      %s71 = ssub.s32 %s25, %s34
      %p72 = scmp.eq.s32.totalorder %s71, 0
      %s74 = sadd.s32 %s73, 1
      %s75 = scalar_select %p72, %s73, %s74
      %p78 = pneg %p72
      %p79 = scmp.eq.s32.totalorder %s16, 7
      %p80 = por %p78, %p79
      %p81 = scmp.ne.s32.totalorder %s73, %s76
      %p82 = scmp.eq.s32.totalorder %s16, 0
      %p83 = por %p81, %p82
      %p84 = scmp.ne.s32.totalorder %s73, %s76
      %p85 = scmp.eq.s32.totalorder %s21, 7
      %p86 = por %p84, %p85
      %p87 = scmp.ne.s32.totalorder %s76, %s77
      %p88 = scmp.eq.s32.totalorder %s21, 0
      %p89 = por %p87, %p88
      %p90 = scmp.ne.s32.totalorder %s76, %s77
      %p91 = scmp.eq.s32.totalorder %s22, 7
      %p92 = por %p90, %p91
      %p94 = scmp.ne.s32.totalorder %s77, %s93
      %p95 = scmp.eq.s32.totalorder %s22, 0
      %p96 = por %p94, %p95
      %s97 = ssub.s32 %s25, %s34
      %p98 = scmp.eq.s32.totalorder %s97, 0
      %s100 = sadd.s32 %s99, 1
      %s101 = scalar_select %p98, %s99, %s100
      %p104 = pneg %p98
      %p105 = scmp.eq.s32.totalorder %s16, 7
      %p106 = por %p104, %p105
      %p107 = scmp.ne.s32.totalorder %s99, %s102
      %p108 = scmp.eq.s32.totalorder %s16, 0
      %p109 = por %p107, %p108
      %p110 = scmp.ne.s32.totalorder %s99, %s102
      %p111 = scmp.eq.s32.totalorder %s21, 7
      %p112 = por %p110, %p111
      %p113 = scmp.ne.s32.totalorder %s102, %s103
      %p114 = scmp.eq.s32.totalorder %s21, 0
      %p115 = por %p113, %p114
      %p116 = scmp.ne.s32.totalorder %s102, %s103
      %p117 = scmp.eq.s32.totalorder %s22, 7
      %p118 = por %p116, %p117
      %p120 = scmp.ne.s32.totalorder %s103, %s119
      %p121 = scmp.eq.s32.totalorder %s22, 0
      %p122 = por %p120, %p121
      %s123 = ssub.s32 %s23, %s42
      %s124 = ssub.s32 %s24, %s38
      %s125 = sor.u32 %s123, %s124
      %s126 = ssub.s32 %s25, %s34
      %s127 = sor.u32 %s125, %s126
      %p128 = scmp.eq.s32.totalorder %s127, 0
      %s130 = sadd.s32 %s129, 1
      %s131 = scalar_select %p128, %s129, %s130
      %p134 = pneg %p128
      %p135 = scmp.eq.s32.totalorder %s16, 7
      %p136 = por %p134, %p135
      %p137 = scmp.ne.s32.totalorder %s129, %s132
      %p138 = scmp.eq.s32.totalorder %s16, 0
      %p139 = por %p137, %p138
      %p140 = scmp.ne.s32.totalorder %s129, %s132
      %p141 = scmp.eq.s32.totalorder %s21, 7
      %p142 = por %p140, %p141
      %p143 = scmp.ne.s32.totalorder %s132, %s133
      %p144 = scmp.eq.s32.totalorder %s21, 0
      %p145 = por %p143, %p144
      %p146 = scmp.ne.s32.totalorder %s132, %s133
      %p147 = scmp.eq.s32.totalorder %s22, 7
      %p148 = por %p146, %p147
      %p150 = scmp.ne.s32.totalorder %s133, %s149
      %p151 = scmp.eq.s32.totalorder %s22, 0
      %p152 = por %p150, %p151
      %p153 = scmp.le.s32.totalorder 1, %s16
      %p154 = scmp.lt.s32.totalorder %s16, 9
      %p155 = pnand %p153, %p154
      %p156 = pneg %p155
      // Predicated region
      $region9: #{tpu_custom_call.1} parent=5 // pred_check
        _
      $region10: #{tpu_custom_call.1} parent=5 // pred_check_branch
        %158 = sbr.rel (%p155) target = $region12
      $region11: #{tpu_custom_call.1} parent=5 // pred_region
        %s159 = ssub.s32 %s16, 1
        // Predicated region
        $region13: #{tpu_custom_call.1} parent=11 // pred_check
          %p160 = pneg %p89
        $region14: #{tpu_custom_call.1} parent=11 // pred_check_branch
          %162 = sbr.rel (%p160) target = $region16
        $region15: #{tpu_custom_call.1} parent=11 // pred_region
          %164 = vsyncadd [#allocation6], 0
          %s165 = smul.addr %s28, 8
          %s166 = scalar_lea.hbm %s1, %s165
          %s168 = sshll.u32 %s166, 4
          %s169 = int_to_ptr.hbm [resolvable:$true] %s168
          %s170 = sshll.u32 [#allocation5], 4
          %s171 = int_to_ptr.vmem [resolvable:$true] %s170
          %173 = dma.hbm_to_vmem [thread:$0]  %s169, 128, %s171, [#allocation6]
        $region16: #{tpu_custom_call.1} parent=11 // pred_fallthru
          _
        // Predicated region
        $region17: #{tpu_custom_call.1} parent=11 // pred_check
          %p174 = pneg %p115
        $region18: #{tpu_custom_call.1} parent=11 // pred_check_branch
          %176 = sbr.rel (%p174) target = $region20
        $region19: #{tpu_custom_call.1} parent=11 // pred_region
          %p177 = scmp.lt.s32.totalorder %s28, 0
          %s178 = scalar_select %p177, %s28, 0
          %s179 = scalar_lea.vmem %s2, %s178
        $region20: #{tpu_custom_call.1} parent=11 // pred_fallthru
          _
      $region12: #{tpu_custom_call.1} parent=5 // pred_fallthru
        _
      %p180 = scmp.lt.s32.totalorder %s16, 8
      // Predicated region
      $region21: #{tpu_custom_call.1} parent=5 // pred_check
        %p181 = pneg %p180
      $region22: #{tpu_custom_call.1} parent=5 // pred_check_branch
        %183 = sbr.rel (%p181) target = $region24
      $region23: #{tpu_custom_call.1} parent=5 // pred_region
        // Predicated region
        $region25: #{tpu_custom_call.1} parent=23 // pred_check
          %p184 = pneg %p57
        $region26: #{tpu_custom_call.1} parent=23 // pred_check_branch
          %186 = sbr.rel (%p184) target = $region28
        $region27: #{tpu_custom_call.1} parent=23 // pred_region
          %s187 = sand.u32 %s47, 1
          %s188 = scalar_lea.sflag [#allocation3], %s187
          %s189 = sand.u32 %s47, 1
          %s190 = smul.addr %s189, 32
          %s191 = scalar_lea.vmem [#allocation2], %s190
          %s192 = smul.u32 2, %s24
          %194 = vsyncadd %s188, 0
          %s195 = smul.addr %s192, 2
          %s196 = smul.addr %s23, 16
          %s197 = sadd.s32 %s195, %s196
          %s198 = smul.addr %s197, 8
          %s199 = scalar_lea.hbm %s0, %s198
          %s200 = sshll.u32 %s199, 4
          %s201 = int_to_ptr.hbm [resolvable:$true] %s200
          %s202 = sshll.u32 %s191, 4
          %s203 = int_to_ptr.vmem [resolvable:$true] %s202
          %208 = dma.hbm_to_vmem [thread:$0]  %s201, 512, %s203, %s188, 128, 128, 8
        $region28: #{tpu_custom_call.1} parent=23 // pred_fallthru
          _
      $region24: #{tpu_custom_call.1} parent=5 // pred_fallthru
        _
      %p209 = scmp.le.s32.totalorder 1, %s16
      %p210 = scmp.lt.s32.totalorder %s16, 9
      %p211 = pnand %p209, %p210
      %p212 = pneg %p211
      // Predicated region
      $region29: #{tpu_custom_call.1} parent=5 // pred_check
        _
      $region30: #{tpu_custom_call.1} parent=5 // pred_check_branch
        %214 = sbr.rel (%p211) target = $region32
      $region31: #{tpu_custom_call.1} parent=5 // pred_region
        %s215 = ssub.s32 %s16, 1
        %s216 = sand.u32 %s50, 1
        %s217 = scalar_lea.sflag [#allocation3], %s216
        %s218 = sand.u32 %s50, 1
        %s219 = smul.addr %s218, 32
        %s220 = scalar_lea.vmem [#allocation2], %s219
        // Predicated region
        $region33: #{tpu_custom_call.1} parent=31 // pred_check
          %p221 = pneg %p63
        $region34: #{tpu_custom_call.1} parent=31 // pred_check_branch
          %223 = sbr.rel (%p221) target = $region36
        $region35: #{tpu_custom_call.1} parent=31 // pred_region
          %225 = dma.done %s217, 512
        $region36: #{tpu_custom_call.1} parent=31 // pred_fallthru
          _
        // Predicated region
        $region37: #{tpu_custom_call.1} parent=31 // pred_check
          %p226 = pneg %p89
        $region38: #{tpu_custom_call.1} parent=31 // pred_check_branch
          %228 = sbr.rel (%p226) target = $region40
        $region39: #{tpu_custom_call.1} parent=31 // pred_region
          %230 = dma.done [#allocation6], 128
        $region40: #{tpu_custom_call.1} parent=31 // pred_fallthru
          _
        %s231 = sand.u32 %s50, 1
        %s232 = scalar_lea.sflag [#allocation3], %s231
        %s233 = sand.u32 %s50, 1
        %s234 = smul.addr %s233, 32
        %s235 = scalar_lea.vmem [#allocation2], %s234
        %p236 = pneg %p63
        %p237 = pneg %p60
        %p238 = pneg %p89
        %p239 = pneg %p86
        %p240 = scmp.lt.s32.totalorder %s28, 0
        %s241 = scalar_select %p240, %s28, 0
        %s242 = scalar_lea.vmem %s2, %s241
        %p243 = pneg %p115
        %p244 = pneg %p112
        %p245 = pneg %p145
        %p246 = pneg %p142
        %s247 = sand.u32 %s132, 1
        %s248 = scalar_lea.sflag [#allocation4], %s247
        %s249 = sand.u32 %s132, 1
        %s250 = smul.addr %s249, 16
        %s251 = scalar_lea.vmem [#allocation7], %s250
        %s252 = smul.u32 2, %s27
        %p253 = scmp.lt.s32.totalorder %s28, 0
        %s254 = scalar_select %p253, %s28, 0
        %s255 = scalar_lea.vmem %s2, %s254
        %s256 = smul.u32 2, %s27
        %v257 = vld [vmem:[#allocation5] sm:$0xff]
        %v258 = vld [vmem:[%s220] sm:$0xff]
        %v259 = vld [vmem:[%s220 + $0x10] sm:$0xff]
        %s260 = scalar_lea.vmem %s220, 8 [#allocation2]
        %v261 = vld [vmem:[%s260] sm:$0xff]
        %v262 = vld [vmem:[%s260 + $0x10] sm:$0xff]
        %vm263 = vcmask 64512
        %v265 = vsel %vm263, %v261, 0
        %v268 = vsel %vm263, %v262, 0
        %270 = vmatpush.msra.mxu0 0.0
        %271 = vmatpush.msra.mxu0 0.0
        %272 = vmatpush.msra.mxu0 0.0
        %273 = vmatpush.msra.mxu0 0.0
        %274 = vmatpush.msra.mxu0 0.0
        %275 = vmatpush.msra.mxu0 0.0
        %276 = vmatpush.msra.mxu0 0.0
        %277 = vmatpush.msra.mxu0 0.0
        %278 = vmatpush.msra.mxu0 0.0
        %279 = vmatpush.msra.mxu0 0.0
        %280 = vmatpush.msra.mxu0 0.0
        %281 = vmatpush.msra.mxu0 0.0
        %282 = vmatpush.msra.mxu0 0.0
        %283 = vmatpush.msra.mxu0 0.0
        %284 = vmatpush.msra.mxu0 0.0
        %285 = vmatpush.msra.mxu0 %v257
        %286 = vmatmul.f32.gmra.mxu0 %v265
        %v287 = vpop.f32.mrf.mxu0
        %v288 = vadd.f32 0.0, %v287
        %289 = vmatmul.f32.gmra.mxu0 %v268
        %v290 = vpop.f32.mrf.mxu0
        %v291 = vadd.f32 0.0, %v290
        %292 = vdwg.mxu0
        %v294 = vsel %vm263, %v258, 0
        %v297 = vsel %vm263, %v259, 0
        %299 = vmatpush.msra.mxu0 0.0
        %300 = vmatpush.msra.mxu0 0.0
        %301 = vmatpush.msra.mxu0 0.0
        %302 = vmatpush.msra.mxu0 0.0
        %303 = vmatpush.msra.mxu0 0.0
        %304 = vmatpush.msra.mxu0 0.0
        %305 = vmatpush.msra.mxu0 0.0
        %306 = vmatpush.msra.mxu0 0.0
        %307 = vmatpush.msra.mxu0 0.0
        %308 = vmatpush.msra.mxu0 0.0
        %309 = vmatpush.msra.mxu0 0.0
        %310 = vmatpush.msra.mxu0 0.0
        %311 = vmatpush.msra.mxu0 0.0
        %312 = vmatpush.msra.mxu0 0.0
        %313 = vmatpush.msra.mxu0 0.0
        %314 = vmatpush.msra.mxu0 %v257
        %315 = vmatmul.f32.gmra.mxu0 %v294
        %v316 = vpop.f32.mrf.mxu0
        %v317 = vadd.f32 %v288, %v316
        %318 = vmatmul.f32.gmra.mxu0 %v297
        %v319 = vpop.f32.mrf.mxu0
        %v320 = vadd.f32 %v291, %v319
        %321 = vdwg.mxu0
        %v322 = vld [vmem:[%s255] sm:$0x1]
        %v324 = vperm.slane %v322, 0
        %v326 = vadd.f32 %v317, %v324
        %v327 = vadd.f32 %v320, %v324
        %328 = vst.msk [vmem:[%s251] sm:$0xff] %vm263, %v326
        %329 = vst.msk [vmem:[%s251 + $0x8] sm:$0xff] %vm263, %v327
        %s330 = sand.u32 %s132, 1
        %s331 = scalar_lea.sflag [#allocation4], %s330
        %s332 = sand.u32 %s132, 1
        %s333 = smul.addr %s332, 16
        %s334 = scalar_lea.vmem [#allocation7], %s333
        // Predicated region
        $region41: #{tpu_custom_call.1} parent=31 // pred_check
          %p335 = pneg %p142
        $region42: #{tpu_custom_call.1} parent=31 // pred_check_branch
          %337 = sbr.rel (%p335) target = $region44
        $region43: #{tpu_custom_call.1} parent=31 // pred_region
          %s338 = smul.u32 2, %s27
          %340 = vsyncadd %s331, 0
          %s341 = sadd.s32 %s28, %s338
          %s342 = smul.addr %s26, 8
          %s343 = sadd.s32 %s341, %s342
          %s344 = smul.addr %s343, 8
          %s345 = scalar_lea.hbm %s3, %s344
          %s346 = sshll.u32 %s334, 4
          %s347 = int_to_ptr.vmem [resolvable:$true] %s346
          %s348 = sshll.u32 %s345, 4
          %s349 = int_to_ptr.hbm [resolvable:$true] %s348
          %354 = dma.vmem_to_hbm [thread:$0]  %s347, 256, %s349, %s331, 128, 128, 8
        $region44: #{tpu_custom_call.1} parent=31 // pred_fallthru
          _
      $region32: #{tpu_custom_call.1} parent=5 // pred_fallthru
        _
      %p355 = scmp.le.s32.totalorder 2, %s16
      // Predicated region
      $region45: #{tpu_custom_call.1} parent=5 // pred_check
        %p356 = pneg %p355
      $region46: #{tpu_custom_call.1} parent=5 // pred_check_branch
        %358 = sbr.rel (%p356) target = $region48
      $region47: #{tpu_custom_call.1} parent=5 // pred_region
        %s359 = ssub.s32 %s16, 2
        // Predicated region
        $region49: #{tpu_custom_call.1} parent=47 // pred_check
          %p360 = pneg %p148
        $region50: #{tpu_custom_call.1} parent=47 // pred_check_branch
          %362 = sbr.rel (%p360) target = $region52
        $region51: #{tpu_custom_call.1} parent=47 // pred_region
          %s363 = sand.u32 %s133, 1
          %s364 = scalar_lea.sflag [#allocation4], %s363
          %s365 = sand.u32 %s133, 1
          %s366 = smul.addr %s365, 16
          %s367 = scalar_lea.vmem [#allocation7], %s366
          %369 = dma.done %s364, 256
        $region52: #{tpu_custom_call.1} parent=47 // pred_fallthru
          _
      $region48: #{tpu_custom_call.1} parent=5 // pred_fallthru
        _
    $region6: #{tpu_custom_call.1} parent=1 // loop_footer
      %s20 = sadd.s32 1, %s16
    $region7: #{tpu_custom_call.1} parent=1 // loop_footer_branch
      %15 = sbr.rel target = $region3
    $region8: #{tpu_custom_call.1} parent=1 // loop_exit
      _
    %370 = vsyncpa [#allocation3], 1
    %s371 = scalar_lea.sflag [#allocation3], 1
    %372 = vsyncpa %s371, 1
    %373 = vsyncpa [#allocation6], 1
    %374 = vsyncpa [#allocation4], 1
    %s375 = scalar_lea.sflag [#allocation4], 1
    %376 = vsyncpa %s375, 1

</llo_original>
